<compile_context>
chip_gen: v7x
topology: tpu7x:2x2x1
jax: 0.10.0
libtpu: 0.0.40
codegen_flags: <defaults>
</compile_context>

<pallas_src>
import functools

import jax
import jax.numpy as jnp
from jax import lax
from jax.experimental import pallas as pl
from jax.experimental.pallas import tpu as pltpu


def _npunit_kernel(a_ref, c_ref, w_ref, nh_ref, nc_ref, *, Cout):
    """One pixel-tile per grid step (batch already folded into the pixel axis).

    a_ref : (KKC, TP)      transposed im2col block of [x | h | ones]  (matmul dtype)
    c_ref : (Cout, TP)     previous cell state                         (f32)
    w_ref : (4*Cout, KKC)  fused conv weights (+ folded bias column)   (matmul dtype)
    nh_ref, nc_ref : (Cout, TP) outputs
    """
    # Single fused MXU matmul: (4*Cout, KKC) @ (KKC, TP) -> (4*Cout, TP), f32 acc.
    gates = jnp.dot(w_ref[...], a_ref[...], preferred_element_type=jnp.float32)

    # PyTorch chunk order along output channels: (i, c, f, o).
    xi = gates[0 * Cout:1 * Cout, :]
    xc = gates[1 * Cout:2 * Cout, :]
    xf = gates[2 * Cout:3 * Cout, :]
    xo = gates[3 * Cout:4 * Cout, :]

    c_prev = c_ref[...].astype(jnp.float32)

    it = jax.nn.sigmoid(xi)
    ft = jax.nn.sigmoid(xf)
    new_c = ft * c_prev + it * jnp.tanh(xc)
    ot = jax.nn.sigmoid(xo)
    new_h = ot * jnp.tanh(new_c)

    nc_ref[...] = new_c.astype(nc_ref.dtype)
    nh_ref[...] = new_h.astype(nh_ref.dtype)


def _pick_pixel_tile(P):
    """Largest lane-dense (multiple-of-128) tile dividing P, preferring >=2 grid
    steps so the pixel axis can shard across TensorCores (v7x megacore)."""
    divisors = [t for t in range(128, P + 1, 128) if P % t == 0]
    if not divisors:
        return P  # fall back to a single full-extent block
    multi_step = [t for t in divisors if t <= 2048 and P // t >= 2]
    return max(multi_step) if multi_step else max(divisors)


def npunit_forward(x, h, c, wx, wh, bx, bh, *, matmul_dtype=jnp.float32):
    """Pallas implementation of NPUnit.forward (NCHW, PyTorch weight layouts).

    x: (N, Cin, H, W), h/c: (N, Cout, H, W)
    wx: (4*Cout, Cin, K, K), wh: (4*Cout, Cout, K, K)   (OIHW, as nn.Conv2d)
    bx, bh: (4*Cout,)
    returns (new_h, new_c), each (N, Cout, H, W)
    """
    N, Cin, H, W = x.shape
    Cout = c.shape[1]
    C4 = 4 * Cout
    K = wx.shape[-1]
    p = (K - 1) // 2
    KK = K * K
    P = N * H * W
    KKC = KK * (Cin + Cout) + 1  # +1: folded-bias row of ones

    # ---------- wrapper-side XLA glue: layouts, im2col, fused weights ----------
    def im2col_t(a, C):
        # a: (N, C, H, W) -> (KK*C, N*H*W), row = tap*C + channel, col = n*HW + y*W + x
        a_pad = jnp.pad(a, ((0, 0), (0, 0), (p, p), (p, p)))
        taps = []
        for dy in range(K):
            for dx in range(K):
                taps.append(a_pad[:, :, dy:dy + H, dx:dx + W].reshape(N, C, H * W))
        cols = jnp.stack(taps, axis=1)                    # (N, KK, C, HW)
        return cols.transpose(1, 2, 0, 3).reshape(KK * C, P)

    A = jnp.concatenate(
        [im2col_t(x, Cin), im2col_t(h, Cout), jnp.ones((1, P), x.dtype)],
        axis=0).astype(matmul_dtype)                      # (KKC, P)

    wx_t = jnp.transpose(wx, (0, 2, 3, 1)).reshape(C4, KK * Cin)
    wh_t = jnp.transpose(wh, (0, 2, 3, 1)).reshape(C4, KK * Cout)
    b_col = (bx + bh).reshape(C4, 1)
    Wf = jnp.concatenate([wx_t, wh_t, b_col], axis=1).astype(matmul_dtype)  # (C4, KKC)

    c_t = jnp.transpose(c.reshape(N, Cout, H * W), (1, 0, 2)).reshape(Cout, P)
    c_t = c_t.astype(jnp.float32)                         # cell state stays f32

    # ---------- Pallas call ----------
    TP = _pick_pixel_tile(P)
    grid = (P // TP,)

    mm_bytes = jnp.dtype(matmul_dtype).itemsize
    block_bytes = (KKC * TP * mm_bytes        # A block
                   + C4 * KKC * mm_bytes      # fused weights (resident)
                   + Cout * TP * 4            # c block
                   + 2 * Cout * TP * 4)       # two output blocks
    vmem_limit = int(min(64 * 2**20, max(32 * 2**20, 8 * block_bytes)))

    kernel = functools.partial(_npunit_kernel, Cout=Cout)

    nh_t, nc_t = pl.pallas_call(
        kernel,
        out_shape=(
            jax.ShapeDtypeStruct((Cout, P), x.dtype),
            jax.ShapeDtypeStruct((Cout, P), x.dtype),
        ),
        grid_spec=pltpu.PrefetchScalarGridSpec(
            num_scalar_prefetch=0,
            grid=grid,
            in_specs=[
                pl.BlockSpec((KKC, TP), lambda t: (0, t)),    # im2col^T tile
                pl.BlockSpec((Cout, TP), lambda t: (0, t)),   # previous cell state
                pl.BlockSpec((C4, KKC), lambda t: (0, 0)),    # fused weights (resident)
            ],
            out_specs=[
                pl.BlockSpec((Cout, TP), lambda t: (0, t)),   # lane-dense stores
                pl.BlockSpec((Cout, TP), lambda t: (0, t)),
            ],
        ),
        compiler_params=pltpu.CompilerParams(
            dimension_semantics=("parallel",),
            vmem_limit_bytes=vmem_limit,
        ),
    )(A, c_t, Wf)

    # Back to NCHW.
    new_h = jnp.transpose(nh_t.reshape(Cout, N, H, W), (1, 0, 2, 3))
    new_c = jnp.transpose(nc_t.reshape(Cout, N, H, W), (1, 0, 2, 3))
    return new_h, new_c


def npunit_reference(x, h, c, wx, wh, bx, bh):
    """Pure-JAX reference matching the PyTorch forward exactly (NCHW / OIHW)."""
    dn = ("NCHW", "OIHW", "NCHW")
    xa = lax.conv_general_dilated(x, wx, (1, 1), "SAME", dimension_numbers=dn,
                                  precision=lax.Precision.HIGHEST)
    xa = xa + bx[None, :, None, None]
    ha = lax.conv_general_dilated(h, wh, (1, 1), "SAME", dimension_numbers=dn,
                                  precision=lax.Precision.HIGHEST)
    ha = ha + bh[None, :, None, None]
    xi, xc, xf, xo = jnp.split(xa, 4, axis=1)
    hi, hc, hf, ho = jnp.split(ha, 4, axis=1)
    it = jax.nn.sigmoid(xi + hi)
    ft = jax.nn.sigmoid(xf + hf)
    new_c = ft * c + it * jnp.tanh(xc + hc)
    ot = jax.nn.sigmoid(xo + ho)
    new_h = ot * jnp.tanh(new_c)
    return new_h, new_c


if __name__ == "__main__":
    # Shapes consistent with NPUnit(in_channels=4, out_channels=8, kernel_size=(3,3)).
    N, H, W = 2, 16, 16
    Cin, Cout, K = 4, 8, 3
    C4 = 4 * Cout

    key = jax.random.PRNGKey(0)
    k_x, k_h, k_c, k_wx, k_wh, k_bx, k_bh = jax.random.split(key, 7)

    x = jax.random.normal(k_x, (N, Cin, H, W), jnp.float32)
    h = jax.random.normal(k_h, (N, Cout, H, W), jnp.float32)
    c = jax.random.normal(k_c, (N, Cout, H, W), jnp.float32)

    # Deterministic parameter init (uniform, roughly PyTorch-Conv2d-like scale).
    bound_x = 1.0 / (Cin * K * K) ** 0.5
    bound_h = 1.0 / (Cout * K * K) ** 0.5
    wx = jax.random.uniform(k_wx, (C4, Cin, K, K), jnp.float32, -bound_x, bound_x)
    wh = jax.random.uniform(k_wh, (C4, Cout, K, K), jnp.float32, -bound_h, bound_h)
    bx = jax.random.uniform(k_bx, (C4,), jnp.float32, -bound_x, bound_x)
    bh = jax.random.uniform(k_bh, (C4,), jnp.float32, -bound_h, bound_h)

    ref_h, ref_c = npunit_reference(x, h, c, wx, wh, bx, bh)

    # f32 matmul path.
    new_h, new_c = npunit_forward(x, h, c, wx, wh, bx, bh)
    jax.block_until_ready((new_h, new_c))
    assert jnp.allclose(new_h, ref_h, atol=2e-3, rtol=2e-3), "f32 new_h mismatch"
    assert jnp.allclose(new_c, ref_c, atol=2e-3, rtol=2e-3), "f32 new_c mismatch"

    # bf16 MXU path (f32 accumulation + f32 epilogue), recommended for v6e/v7x.
    bf_h, bf_c = npunit_forward(x, h, c, wx, wh, bx, bh, matmul_dtype=jnp.bfloat16)
    jax.block_until_ready((bf_h, bf_c))
    assert jnp.allclose(bf_h, ref_h, atol=1e-1, rtol=1e-1), "bf16 new_h mismatch"
    assert jnp.allclose(bf_c, ref_c, atol=1e-1, rtol=1e-1), "bf16 new_c mismatch"

    print("KERNEL_OK")
</pallas_src>

<mosaic_0001>
module attributes {stable_mosaic.version = 11 : i64} {
  func.func @_npunit_kernel(%arg0: i32, %arg1: memref<109x256xf32, #tpu.memory_space<vmem>>, %arg2: memref<8x256xf32, #tpu.memory_space<vmem>>, %arg3: memref<32x109xf32, #tpu.memory_space<vmem>>, %arg4: memref<8x256xf32, #tpu.memory_space<vmem>>, %arg5: memref<8x256xf32, #tpu.memory_space<vmem>>) attributes {dimension_semantics = [#tpu.dimension_semantics<parallel>], iteration_bounds = array<i64: 2>, scalar_prefetch = 0 : i64, scratch_operands = 0 : i64, tpu.core_type = #tpu.core_type<tc>, window_params = [{transform_indices = @transform_0, window_bounds = array<i64: 109, 256>}, {transform_indices = @transform_1, window_bounds = array<i64: 8, 256>}, {pipeline_mode = #tpu.pipeline_mode<synchronous>, transform_indices = @transform_2, window_bounds = array<i64: 32, 109>}, {transform_indices = @transform_3, window_bounds = array<i64: 8, 256>}, {transform_indices = @transform_4, window_bounds = array<i64: 8, 256>}]} {
    %c0 = arith.constant 0 : index
    %c0_0 = arith.constant 0 : index
    %0 = vector.load %arg3[%c0, %c0_0] : memref<32x109xf32, #tpu.memory_space<vmem>>, vector<32x109xf32>
    %c0_1 = arith.constant 0 : index
    %c0_2 = arith.constant 0 : index
    %1 = vector.load %arg1[%c0_1, %c0_2] : memref<109x256xf32, #tpu.memory_space<vmem>>, vector<109x256xf32>
    %cst = arith.constant dense<0.000000e+00> : vector<32x256xf32>
    %2 = tpu.matmul %0, %1, %cst {dimension_numbers = #tpu.dot_dimension_numbers<[1], [0], [0], [1], [0, 0, 1, 1], [], []>} : vector<32x109xf32>, vector<109x256xf32>, vector<32x256xf32> -> vector<32x256xf32>
    %3 = vector.extract_strided_slice %2 {offsets = [0, 0], sizes = [8, 256], strides = [1, 1]} : vector<32x256xf32> to vector<8x256xf32>
    %4 = vector.extract_strided_slice %2 {offsets = [8, 0], sizes = [8, 256], strides = [1, 1]} : vector<32x256xf32> to vector<8x256xf32>
    %5 = vector.extract_strided_slice %2 {offsets = [16, 0], sizes = [8, 256], strides = [1, 1]} : vector<32x256xf32> to vector<8x256xf32>
    %6 = vector.extract_strided_slice %2 {offsets = [24, 0], sizes = [8, 256], strides = [1, 1]} : vector<32x256xf32> to vector<8x256xf32>
    %c0_3 = arith.constant 0 : index
    %c0_4 = arith.constant 0 : index
    %7 = vector.load %arg2[%c0_3, %c0_4] : memref<8x256xf32, #tpu.memory_space<vmem>>, vector<8x256xf32>
    %8 = arith.negf %3 : vector<8x256xf32>
    %9 = math.exp %8 : vector<8x256xf32>
    %cst_5 = arith.constant 1.000000e+00 : f32
    %10 = vector.broadcast %cst_5 : f32 to vector<8x256xf32>
    %11 = arith.addf %10, %9 : vector<8x256xf32>
    %12 = arith.divf %10, %11 : vector<8x256xf32>
    %13 = arith.negf %5 : vector<8x256xf32>
    %14 = math.exp %13 : vector<8x256xf32>
    %cst_6 = arith.constant 1.000000e+00 : f32
    %15 = vector.broadcast %cst_6 : f32 to vector<8x256xf32>
    %16 = arith.addf %15, %14 : vector<8x256xf32>
    %17 = arith.divf %15, %16 : vector<8x256xf32>
    %18 = arith.mulf %17, %7 : vector<8x256xf32>
    %19 = math.tanh %4 : vector<8x256xf32>
    %20 = arith.mulf %12, %19 : vector<8x256xf32>
    %21 = arith.addf %18, %20 : vector<8x256xf32>
    %22 = arith.negf %6 : vector<8x256xf32>
    %23 = math.exp %22 : vector<8x256xf32>
    %cst_7 = arith.constant 1.000000e+00 : f32
    %24 = vector.broadcast %cst_7 : f32 to vector<8x256xf32>
    %25 = arith.addf %24, %23 : vector<8x256xf32>
    %26 = arith.divf %24, %25 : vector<8x256xf32>
    %27 = math.tanh %21 : vector<8x256xf32>
    %28 = arith.mulf %26, %27 : vector<8x256xf32>
    %c0_8 = arith.constant 0 : index
    %c0_9 = arith.constant 0 : index
    %29 = vector.load %arg5[%c0_8, %c0_9] : memref<8x256xf32, #tpu.memory_space<vmem>>, vector<8x256xf32>
    tpu.vector_store %arg5[%c0_8, %c0_9], %21 {strides = array<i32>} : memref<8x256xf32, #tpu.memory_space<vmem>>, vector<8x256xf32>,
    %c0_10 = arith.constant 0 : index
    %c0_11 = arith.constant 0 : index
    %30 = vector.load %arg4[%c0_10, %c0_11] : memref<8x256xf32, #tpu.memory_space<vmem>>, vector<8x256xf32>
    tpu.vector_store %arg4[%c0_10, %c0_11], %28 {strides = array<i32>} : memref<8x256xf32, #tpu.memory_space<vmem>>, vector<8x256xf32>,
    return
  }
  func.func @transform_0(%arg0: i32) -> (i32, i32) {
    %c0_i32 = arith.constant 0 : i32
    %c0_i32_0 = arith.constant 0 : i32
    return %c0_i32, %arg0 : i32, i32
  }
  func.func @transform_1(%arg0: i32) -> (i32, i32) {
    %c0_i32 = arith.constant 0 : i32
    %c0_i32_0 = arith.constant 0 : i32
    return %c0_i32, %arg0 : i32, i32
  }
  func.func @transform_2(%arg0: i32) -> (i32, i32) {
    %c0_i32 = arith.constant 0 : i32
    %c0_i32_0 = arith.constant 0 : i32
    %c0_i32_1 = arith.constant 0 : i32
    return %c0_i32, %c0_i32_0 : i32, i32
  }
  func.func @transform_3(%arg0: i32) -> (i32, i32) {
    %c0_i32 = arith.constant 0 : i32
    %c0_i32_0 = arith.constant 0 : i32
    return %c0_i32, %arg0 : i32, i32
  }
  func.func @transform_4(%arg0: i32) -> (i32, i32) {
    %c0_i32 = arith.constant 0 : i32
    %c0_i32_0 = arith.constant 0 : i32
    return %c0_i32, %arg0 : i32, i32
  }
}

</mosaic_0001>

<llo_original>
// kernel: tpu_custom_call.1
$region0: #{tpu_custom_call.1}
  #allocation0 [shape = 'u32[]', space=smem, size = 0x4, offset = 0x4, fixed_abs, tag = 'smem constant byte address 0x4 - core index']
  #allocation1 [shape = 'u32[144,128]{1,0:T(1,128)}', space=vmem, size = 0x12000, scoped, tag = 'internal scratch']
  %s0 = inlined_call_operand.hbm [shape: f32[109,512], index: 0, kind: input, shape index: {}]
  %s1 = inlined_call_operand.hbm [shape: f32[8,512], index: 1, kind: input, shape index: {}]
  %s2 = inlined_call_operand.hbm [shape: f32[32,109], index: 2, kind: input, shape index: {}]
  %s3 = inlined_call_operand.hbm [shape: f32[8,512], index: 3, kind: output, shape index: {0}]
  %s4 = inlined_call_operand.hbm [shape: f32[8,512], index: 4, kind: output, shape index: {1}]
  %5 = xla_tuple %s3, %s4
  %s6 = sld [smem:[#allocation0]]
  $region65: #{tpu_custom_call.1} parent=0
    _
  %s8 = ssub.s32 1, %s6
  %s9 = scalar_select 0, %s8, %s6
  $region1: #{tpu_custom_call.1} parent=0
    #allocation2 [shape = 'u8[229376]{0}', space=vmem, size = 0x38000, scoped, tag = 'input window, operand 0']
    #allocation3 [shape = 's32[2]{0}', space=sflag, size = 0x8, scoped, tag = 'scoped memory for tpu_custom_call.1']
    #allocation4 [shape = 's32[2]{0}', space=sflag, size = 0x8, scoped, tag = 'scoped memory for tpu_custom_call.1']
    #allocation5 [shape = 'u8[16384]{0}', space=vmem, size = 0x4000, scoped, tag = 'input window, operand 1']
    #allocation6 [shape = 's32[2]{0}', space=sflag, size = 0x8, scoped, tag = 'scoped memory for tpu_custom_call.1']
    #allocation7 [shape = 'u8[16384]{0}', space=vmem, size = 0x4000, scoped, tag = 'input window, operand 2, single buffered']
    #allocation8 [shape = 'u8[16384]{0}', space=vmem, size = 0x4000, scoped, tag = 'output window, operand 0']
    #allocation9 [shape = 'u8[16384]{0}', space=vmem, size = 0x4000, scoped, tag = 'output window, operand 1']
    #allocation10 [shape = 's32[2]{0}', space=sflag, size = 0x8, scoped, tag = 'scoped memory for tpu_custom_call.1']
    %10 = vsyncpa [#allocation3], 0
    %s11 = scalar_lea.sflag [#allocation3], 1
    %12 = vsyncpa %s11, 0
    %13 = vsyncpa [#allocation6], 0
    %s14 = scalar_lea.sflag [#allocation6], 1
    %15 = vsyncpa %s14, 0
    %16 = vsyncpa [#allocation4], 0
    %s17 = scalar_lea.sflag [#allocation4], 1
    %18 = vsyncpa %s17, 0
    %19 = vsyncpa [#allocation10], 0
    %s20 = scalar_lea.sflag [#allocation10], 1
    %21 = vsyncpa %s20, 0
    loop: start=0, step=1, limit=4
    $region2: #{tpu_custom_call.1} parent=1 // loop_pre_header
      _
    $region3: #{tpu_custom_call.1} parent=1 // loop_header
      %s23 = sphi 0, %s27
      %p24 = scmp.ge.s32.totalorder %s23, 4
      %s33 = sphi 0, %s35
      %s36 = sphi 0, %s33
      %s37 = sphi 0, %s36
      %s53 = sphi 0, %s37
      %s59 = sphi 0, %s61
      %s62 = sphi 0, %s59
      %s63 = sphi 0, %s62
      %s79 = sphi 0, %s63
      %s83 = sphi 0, %s83
      %s85 = sphi 0, %s83
      %s86 = sphi 0, %s85
      %s100 = sphi 0, %s86
      %s106 = sphi 0, %s108
      %s109 = sphi 0, %s106
      %s110 = sphi 0, %s109
      %s126 = sphi 0, %s110
      %s132 = sphi 0, %s134
      %s135 = sphi 0, %s132
      %s136 = sphi 0, %s135
      %s152 = sphi 0, %s136
    $region4: #{tpu_custom_call.1} parent=1 // loop_header_branch
      %26 = sbr.rel (%p24) target = $region8
    $region5: #{tpu_custom_call.1} parent=1 // loop_body
      %s28 = ssub.s32 %s23, 1
      %s29 = ssub.s32 %s23, 2
      %s30 = sadd.s32 %s23, 1
      %s31 = ssub.s32 %s23, %s30
      %p32 = scmp.eq.s32.totalorder %s31, 0
      %s34 = sadd.s32 %s33, 1
      %s35 = scalar_select %p32, %s33, %s34
      %p38 = pneg %p32
      %p39 = scmp.eq.s32.totalorder %s23, 1
      %p40 = por %p38, %p39
      %p41 = scmp.ne.s32.totalorder %s33, %s36
      %p42 = scmp.eq.s32.totalorder %s23, 0
      %p43 = por %p41, %p42
      %p44 = scmp.ne.s32.totalorder %s33, %s36
      %p45 = scmp.eq.s32.totalorder %s28, 1
      %p46 = por %p44, %p45
      %p47 = scmp.ne.s32.totalorder %s36, %s37
      %p48 = scmp.eq.s32.totalorder %s28, 0
      %p49 = por %p47, %p48
      %p50 = scmp.ne.s32.totalorder %s36, %s37
      %p51 = scmp.eq.s32.totalorder %s29, 1
      %p52 = por %p50, %p51
      %p54 = scmp.ne.s32.totalorder %s37, %s53
      %p55 = scmp.eq.s32.totalorder %s29, 0
      %p56 = por %p54, %p55
      %s57 = ssub.s32 %s23, %s30
      %p58 = scmp.eq.s32.totalorder %s57, 0
      %s60 = sadd.s32 %s59, 1
      %s61 = scalar_select %p58, %s59, %s60
      %p64 = pneg %p58
      %p65 = scmp.eq.s32.totalorder %s23, 1
      %p66 = por %p64, %p65
      %p67 = scmp.ne.s32.totalorder %s59, %s62
      %p68 = scmp.eq.s32.totalorder %s23, 0
      %p69 = por %p67, %p68
      %p70 = scmp.ne.s32.totalorder %s59, %s62
      %p71 = scmp.eq.s32.totalorder %s28, 1
      %p72 = por %p70, %p71
      %p73 = scmp.ne.s32.totalorder %s62, %s63
      %p74 = scmp.eq.s32.totalorder %s28, 0
      %p75 = por %p73, %p74
      %p76 = scmp.ne.s32.totalorder %s62, %s63
      %p77 = scmp.eq.s32.totalorder %s29, 1
      %p78 = por %p76, %p77
      %p80 = scmp.ne.s32.totalorder %s63, %s79
      %p81 = scmp.eq.s32.totalorder %s29, 0
      %p82 = por %p80, %p81
      %s84 = sadd.s32 %s83, 1
      %p87 = scmp.eq.s32.totalorder %s23, 1
      %p88 = scmp.ne.s32.totalorder %s83, %s85
      %p89 = scmp.eq.s32.totalorder %s23, 0
      %p90 = por %p88, %p89
      %p91 = scmp.ne.s32.totalorder %s83, %s85
      %p92 = scmp.eq.s32.totalorder %s28, 1
      %p93 = por %p91, %p92
      %p94 = scmp.ne.s32.totalorder %s85, %s86
      %p95 = scmp.eq.s32.totalorder %s28, 0
      %p96 = por %p94, %p95
      %p97 = scmp.ne.s32.totalorder %s85, %s86
      %p98 = scmp.eq.s32.totalorder %s29, 1
      %p99 = por %p97, %p98
      %p101 = scmp.ne.s32.totalorder %s86, %s100
      %p102 = scmp.eq.s32.totalorder %s29, 0
      %p103 = por %p101, %p102
      %s104 = ssub.s32 %s23, %s30
      %p105 = scmp.eq.s32.totalorder %s104, 0
      %s107 = sadd.s32 %s106, 1
      %s108 = scalar_select %p105, %s106, %s107
      %p111 = pneg %p105
      %p112 = scmp.eq.s32.totalorder %s23, 1
      %p113 = por %p111, %p112
      %p114 = scmp.ne.s32.totalorder %s106, %s109
      %p115 = scmp.eq.s32.totalorder %s23, 0
      %p116 = por %p114, %p115
      %p117 = scmp.ne.s32.totalorder %s106, %s109
      %p118 = scmp.eq.s32.totalorder %s28, 1
      %p119 = por %p117, %p118
      %p120 = scmp.ne.s32.totalorder %s109, %s110
      %p121 = scmp.eq.s32.totalorder %s28, 0
      %p122 = por %p120, %p121
      %p123 = scmp.ne.s32.totalorder %s109, %s110
      %p124 = scmp.eq.s32.totalorder %s29, 1
      %p125 = por %p123, %p124
      %p127 = scmp.ne.s32.totalorder %s110, %s126
      %p128 = scmp.eq.s32.totalorder %s29, 0
      %p129 = por %p127, %p128
      %s130 = ssub.s32 %s23, %s30
      %p131 = scmp.eq.s32.totalorder %s130, 0
      %s133 = sadd.s32 %s132, 1
      %s134 = scalar_select %p131, %s132, %s133
      %p137 = pneg %p131
      %p138 = scmp.eq.s32.totalorder %s23, 1
      %p139 = por %p137, %p138
      %p140 = scmp.ne.s32.totalorder %s132, %s135
      %p141 = scmp.eq.s32.totalorder %s23, 0
      %p142 = por %p140, %p141
      %p143 = scmp.ne.s32.totalorder %s132, %s135
      %p144 = scmp.eq.s32.totalorder %s28, 1
      %p145 = por %p143, %p144
      %p146 = scmp.ne.s32.totalorder %s135, %s136
      %p147 = scmp.eq.s32.totalorder %s28, 0
      %p148 = por %p146, %p147
      %p149 = scmp.ne.s32.totalorder %s135, %s136
      %p150 = scmp.eq.s32.totalorder %s29, 1
      %p151 = por %p149, %p150
      %p153 = scmp.ne.s32.totalorder %s136, %s152
      %p154 = scmp.eq.s32.totalorder %s29, 0
      %p155 = por %p153, %p154
      %p156 = scmp.le.s32.totalorder 1, %s23
      %p157 = scmp.lt.s32.totalorder %s23, 3
      %p158 = pnand %p156, %p157
      %p159 = pneg %p158
      // Predicated region
      $region9: #{tpu_custom_call.1} parent=5 // pred_check
        _
      $region10: #{tpu_custom_call.1} parent=5 // pred_check_branch
        %161 = sbr.rel (%p158) target = $region12
      $region11: #{tpu_custom_call.1} parent=5 // pred_region
        %s162 = ssub.s32 %s23, 1
        // Predicated region
        $region13: #{tpu_custom_call.1} parent=11 // pred_check
          %p163 = pneg %p96
        $region14: #{tpu_custom_call.1} parent=11 // pred_check_branch
          %165 = sbr.rel (%p163) target = $region16
        $region15: #{tpu_custom_call.1} parent=11 // pred_region
          %s167 = ssub.s32 512, 512
          %168 = vsyncadd [#allocation6], %s167
          %s169 = sshll.u32 [#allocation7], 4
          %s170 = int_to_ptr.vmem [resolvable:$true] %s169
          %175 = dma.hbm_to_vmem [thread:$0]  %s2, 512, %s170, [#allocation6], 128, 128, 8
        $region16: #{tpu_custom_call.1} parent=11 // pred_fallthru
          _
      $region12: #{tpu_custom_call.1} parent=5 // pred_fallthru
        _
      %p176 = scmp.lt.s32.totalorder %s23, 2
      // Predicated region
      $region17: #{tpu_custom_call.1} parent=5 // pred_check
        %p177 = pneg %p176
      $region18: #{tpu_custom_call.1} parent=5 // pred_check_branch
        %179 = sbr.rel (%p177) target = $region20
      $region19: #{tpu_custom_call.1} parent=5 // pred_region
        // Predicated region
        $region21: #{tpu_custom_call.1} parent=19 // pred_check
          %p180 = pneg %p43
        $region22: #{tpu_custom_call.1} parent=19 // pred_check_branch
          %182 = sbr.rel (%p180) target = $region24
        $region23: #{tpu_custom_call.1} parent=19 // pred_region
          %s183 = sand.u32 %s33, 1
          %s184 = scalar_lea.sflag [#allocation3], %s183
          %s185 = sand.u32 %s33, 1
          %s186 = smul.addr %s185, 224
          %s187 = scalar_lea.vmem [#allocation2], %s186
          %s188 = smul.u32 2, %s23
          %s190 = ssub.s32 3584, 3584
          %191 = vsyncadd %s184, %s190
          %s192 = smul.addr %s188, 128
          %s193 = scalar_lea.hbm %s0, %s192
          %s194 = sshll.u32 %s187, 4
          %s195 = int_to_ptr.vmem [resolvable:$true] %s194
          %200 = dma.hbm_to_vmem [thread:$0]  %s193, 3584, %s195, %s184, 512, 256, 16
        $region24: #{tpu_custom_call.1} parent=19 // pred_fallthru
          _
        // Predicated region
        $region25: #{tpu_custom_call.1} parent=19 // pred_check
          %p201 = pneg %p69
        $region26: #{tpu_custom_call.1} parent=19 // pred_check_branch
          %203 = sbr.rel (%p201) target = $region28
        $region27: #{tpu_custom_call.1} parent=19 // pred_region
          %s204 = sand.u32 %s23, 1
          %s205 = scalar_lea.sflag [#allocation6], %s204
          %s206 = sand.u32 %s59, 1
          %s207 = smul.addr %s206, 16
          %s208 = scalar_lea.vmem [#allocation5], %s207
          %s209 = smul.u32 2, %s23
          %s211 = ssub.s32 256, 256
          %212 = vsyncadd %s205, %s211
          %s213 = smul.addr %s209, 128
          %s214 = scalar_lea.hbm %s1, %s213
          %s216 = sshll.u32 %s208, 4
          %s217 = int_to_ptr.vmem [resolvable:$true] %s216
          %219 = dma.hbm_to_vmem [thread:$0]  %s214, 256, %s217, %s205
        $region28: #{tpu_custom_call.1} parent=19 // pred_fallthru
          _
      $region20: #{tpu_custom_call.1} parent=5 // pred_fallthru
        _
      %p220 = scmp.le.s32.totalorder 1, %s23
      %p221 = scmp.lt.s32.totalorder %s23, 3
      %p222 = pnand %p220, %p221
      %p223 = pneg %p222
      // Predicated region
      $region29: #{tpu_custom_call.1} parent=5 // pred_check
        _
      $region30: #{tpu_custom_call.1} parent=5 // pred_check_branch
        %225 = sbr.rel (%p222) target = $region32
      $region31: #{tpu_custom_call.1} parent=5 // pred_region
        %s226 = ssub.s32 %s23, 1
        %s227 = sand.u32 %s36, 1
        %s228 = scalar_lea.sflag [#allocation3], %s227
        %s229 = sand.u32 %s36, 1
        %s230 = smul.addr %s229, 224
        %s231 = scalar_lea.vmem [#allocation2], %s230
        // Predicated region
        $region33: #{tpu_custom_call.1} parent=31 // pred_check
          %p232 = pneg %p49
        $region34: #{tpu_custom_call.1} parent=31 // pred_check_branch
          %234 = sbr.rel (%p232) target = $region36
        $region35: #{tpu_custom_call.1} parent=31 // pred_region
          %235 = dma.done %s228, 3584
        $region36: #{tpu_custom_call.1} parent=31 // pred_fallthru
          _
        %s236 = sand.u32 %s28, 1
        %s237 = scalar_lea.sflag [#allocation6], %s236
        %s238 = sand.u32 %s62, 1
        %s239 = smul.addr %s238, 16
        %s240 = scalar_lea.vmem [#allocation5], %s239
        // Predicated region
        $region37: #{tpu_custom_call.1} parent=31 // pred_check
          %p241 = pneg %p75
        $region38: #{tpu_custom_call.1} parent=31 // pred_check_branch
          %243 = sbr.rel (%p241) target = $region40
        $region39: #{tpu_custom_call.1} parent=31 // pred_region
          %244 = dma.done %s237, 256
        $region40: #{tpu_custom_call.1} parent=31 // pred_fallthru
          _
        // Predicated region
        $region41: #{tpu_custom_call.1} parent=31 // pred_check
          %p245 = pneg %p96
        $region42: #{tpu_custom_call.1} parent=31 // pred_check_branch
          %247 = sbr.rel (%p245) target = $region44
        $region43: #{tpu_custom_call.1} parent=31 // pred_region
          %248 = dma.done [#allocation6], 512
        $region44: #{tpu_custom_call.1} parent=31 // pred_fallthru
          _
        %s249 = sand.u32 %s36, 1
        %s250 = scalar_lea.sflag [#allocation3], %s249
        %s251 = sand.u32 %s36, 1
        %s252 = smul.addr %s251, 224
        %s253 = scalar_lea.vmem [#allocation2], %s252
        %p254 = pneg %p49
        %p255 = pneg %p46
        %s256 = sand.u32 %s28, 1
        %s257 = scalar_lea.sflag [#allocation6], %s256
        %s258 = sand.u32 %s62, 1
        %s259 = smul.addr %s258, 16
        %s260 = scalar_lea.vmem [#allocation5], %s259
        %p261 = pneg %p75
        %p262 = pneg %p72
        %p263 = pneg %p96
        %p264 = pneg %p93
        %p265 = pneg %p122
        %p266 = pneg %p119
        %s267 = sand.u32 %s109, 1
        %s268 = scalar_lea.sflag [#allocation4], %s267
        %s269 = sand.u32 %s109, 1
        %s270 = smul.addr %s269, 16
        %s271 = scalar_lea.vmem [#allocation8], %s270
        %p272 = pneg %p148
        %p273 = pneg %p145
        %s274 = sand.u32 %s135, 1
        %s275 = scalar_lea.sflag [#allocation10], %s274
        %s276 = sand.u32 %s135, 1
        %s277 = smul.addr %s276, 16
        %s278 = scalar_lea.vmem [#allocation9], %s277
        %s279 = smul.u32 2, %s28
        %s280 = smul.u32 2, %s28
        %s281 = smul.u32 2, %s28
        %s282 = smul.u32 2, %s28
        %v283 = vld [vmem:[#allocation7] sm:$0xff]
        %v284 = vld [vmem:[#allocation7 + $0x8] sm:$0xff]
        %v285 = vld [vmem:[#allocation7 + $0x10] sm:$0xff]
        %v286 = vld [vmem:[#allocation7 + $0x18] sm:$0xff]
        %v287 = vld [vmem:[%s231] sm:$0xff]
        %v288 = vld [vmem:[%s231 + $0x8] sm:$0xff]
        %v289 = vld [vmem:[%s231 + $0x10] sm:$0xff]
        %v290 = vld [vmem:[%s231 + $0x18] sm:$0xff]
        %v291 = vld [vmem:[%s231 + $0x20] sm:$0xff]
        %v292 = vld [vmem:[%s231 + $0x28] sm:$0xff]
        %v293 = vld [vmem:[%s231 + $0x30] sm:$0xff]
        %v294 = vld [vmem:[%s231 + $0x38] sm:$0xff]
        %v295 = vld [vmem:[%s231 + $0x40] sm:$0xff]
        %v296 = vld [vmem:[%s231 + $0x48] sm:$0xff]
        %v297 = vld [vmem:[%s231 + $0x50] sm:$0xff]
        %v298 = vld [vmem:[%s231 + $0x58] sm:$0xff]
        %v299 = vld [vmem:[%s231 + $0x60] sm:$0xff]
        %v300 = vld [vmem:[%s231 + $0x68] sm:$0xff]
        %v301 = vld [vmem:[%s231 + $0x70] sm:$0xff]
        %v302 = vld [vmem:[%s231 + $0x78] sm:$0xff]
        %v303 = vld [vmem:[%s231 + $0x80] sm:$0xff]
        %v304 = vld [vmem:[%s231 + $0x88] sm:$0xff]
        %v305 = vld [vmem:[%s231 + $0x90] sm:$0xff]
        %v306 = vld [vmem:[%s231 + $0x98] sm:$0xff]
        %v307 = vld [vmem:[%s231 + $0xa0] sm:$0xff]
        %v308 = vld [vmem:[%s231 + $0xa8] sm:$0xff]
        %v309 = vld [vmem:[%s231 + $0xb0] sm:$0xff]
        %v310 = vld [vmem:[%s231 + $0xb8] sm:$0xff]
        %v311 = vld [vmem:[%s231 + $0xc0] sm:$0xff]
        %v312 = vld [vmem:[%s231 + $0xc8] sm:$0xff]
        %v313 = vld [vmem:[%s231 + $0xd0] sm:$0x1f]
        %v314 = vld [vmem:[%s231 + $0xd8] sm:$0x1f]
        %vm315 = vcmask 891904
        %v317 = vsel %vm315, %v283, 0
        %v320 = vsel %vm315, %v284, 0
        %v323 = vsel %vm315, %v285, 0
        %v326 = vsel %vm315, %v286, 0
        %vm328 = vcmask 1044480
        %v330 = vsel %vm328, %v313, 0
        %v333 = vsel %vm328, %v314, 0
        %335 = vmatprep.subr.mxu0 %v288
        %336 = vmatpush1.msra.mxu0 %v287
        %337 = vmatprep.subr.mxu0 %v290
        %338 = vmatpush1.msra.mxu0 %v289
        %339 = vmatprep.subr.mxu0 %v292
        %340 = vmatpush1.msra.mxu0 %v291
        %341 = vmatprep.subr.mxu0 %v294
        %342 = vmatpush1.msra.mxu0 %v293
        %343 = vmatprep.subr.mxu0 %v296
        %344 = vmatpush1.msra.mxu0 %v295
        %345 = vmatprep.subr.mxu0 %v298
        %346 = vmatpush1.msra.mxu0 %v297
        %347 = vmatprep.subr.mxu0 %v300
        %348 = vmatpush1.msra.mxu0 %v299
        %349 = vmatprep.subr.mxu0 %v302
        %350 = vmatpush1.msra.mxu0 %v301
        %351 = vmatprep.subr.mxu0 %v304
        %352 = vmatpush1.msra.mxu0 %v303
        %353 = vmatprep.subr.mxu0 %v306
        %354 = vmatpush1.msra.mxu0 %v305
        %355 = vmatprep.subr.mxu0 %v308
        %356 = vmatpush1.msra.mxu0 %v307
        %357 = vmatprep.subr.mxu0 %v310
        %358 = vmatpush1.msra.mxu0 %v309
        %359 = vmatprep.subr.mxu0 %v312
        %360 = vmatpush1.msra.mxu0 %v311
        %361 = vmatprep.subr.mxu0 %v333
        %362 = vmatpush1.msra.mxu0 %v330
        %363 = vmatprep.subr.mxu0 0.0
        %364 = vmatpush1.msra.mxu0 0.0
        %365 = vmatprep.subr.mxu0 0.0
        %366 = vmatpush1.msra.mxu0 0.0
        %367 = vmatprep.subr.mxu0 0.0
        %368 = vmatpush1.msra.mxu0 0.0
        %369 = vmatprep.subr.mxu0 0.0
        %370 = vmatpush1.msra.mxu0 0.0
        %371 = vmatprep.subr.mxu0 0.0
        %372 = vmatpush1.msra.mxu0 0.0
        %373 = vmatprep.subr.mxu0 0.0
        %374 = vmatpush1.msra.mxu0 0.0
        %375 = vmatprep.subr.mxu0 0.0
        %376 = vmatpush1.msra.mxu0 0.0
        %377 = vmatprep.subr.mxu0 0.0
        %378 = vmatpush1.msra.mxu0 0.0
        %379 = vmatprep.subr.mxu0 0.0
        %380 = vmatpush1.msra.mxu0 0.0
        %381 = vmatprep.subr.mxu0 0.0
        %382 = vmatpush1.msra.mxu0 0.0
        %383 = vmatprep.subr.mxu0 0.0
        %384 = vmatpush1.msra.mxu0 0.0
        %385 = vmatprep.subr.mxu0 0.0
        %386 = vmatpush1.msra.mxu0 0.0
        %387 = vmatprep.subr.mxu0 0.0
        %388 = vmatpush1.msra.mxu0 0.0
        %389 = vmatprep.subr.mxu0 0.0
        %390 = vmatpush1.msra.mxu0 0.0
        %391 = vmatprep.subr.mxu0 0.0
        %392 = vmatpush1.msra.mxu0 0.0
        %393 = vmatprep.subr.mxu0 0.0
        %394 = vmatpush1.msra.mxu0 0.0
        %395 = vmatprep.subr.mxu0 0.0
        %396 = vmatpush1.msra.mxu0 0.0
        %397 = vmatprep.subr.mxu0 0.0
        %398 = vmatpush1.msra.mxu0 0.0
        %399 = vmatprep.mubr.f32.mxu0 0.0
        %400 = vmatmul.mubr.f32.gmra.mrb[0].mxu0 %v317
        %v401 = vpop.f32.mrb[0].mxu0
        %v402 = vadd.f32 0.0, %v401
        %v403 = vpop.f32.mrb[0].mxu0
        %v404 = vadd.f32 0.0, %v403
        %405 = vmatprep.mubr.f32.mxu0 0.0
        %406 = vmatmul.mubr.f32.gmra.mrb[0].mxu0 %v320
        %v407 = vpop.f32.mrb[0].mxu0
        %v408 = vadd.f32 0.0, %v407
        %v409 = vpop.f32.mrb[0].mxu0
        %v410 = vadd.f32 0.0, %v409
        %411 = vmatprep.mubr.f32.mxu0 0.0
        %412 = vmatmul.mubr.f32.gmra.mrb[0].mxu0 %v323
        %v413 = vpop.f32.mrb[0].mxu0
        %v414 = vadd.f32 0.0, %v413
        %v415 = vpop.f32.mrb[0].mxu0
        %v416 = vadd.f32 0.0, %v415
        %417 = vmatprep.mubr.f32.mxu0 0.0
        %418 = vmatmul.mubr.f32.gmra.mrb[0].mxu0 %v326
        %v419 = vpop.f32.mrb[0].mxu0
        %v420 = vadd.f32 0.0, %v419
        %v421 = vpop.f32.mrb[0].mxu0
        %v422 = vadd.f32 0.0, %v421
        %423 = vdwg.mxu0
        %v424 = vld [vmem:[%s240] sm:$0xff]
        %v425 = vld [vmem:[%s240 + $0x8] sm:$0xff]
        %v426 = vxor.u32 %v402, 2147483648
        %v427 = vxor.u32 %v404, 2147483648
        %v428 = vmul.f32 %v426, 1.442695
        %v429 = vpow.pop %v428
        %v430 = vmul.f32 %v427, 1.442695
        %v431 = vpow.pop %v430
        %v432 = vadd.f32 %v429, 1.0
        %v433 = vadd.f32 %v431, 1.0
        %v434 = vrcp.pop %v432
        %v435 = vmul.f32 1.0, %v434
        %v436 = vrcp.pop %v433
        %v437 = vmul.f32 1.0, %v436
        %v438 = vxor.u32 %v414, 2147483648
        %v439 = vxor.u32 %v416, 2147483648
        %v440 = vmul.f32 %v438, 1.442695
        %v441 = vpow.pop %v440
        %v442 = vmul.f32 %v439, 1.442695
        %v443 = vpow.pop %v442
        %v444 = vadd.f32 %v441, 1.0
        %v445 = vadd.f32 %v443, 1.0
        %v446 = vrcp.pop %v444
        %v447 = vmul.f32 1.0, %v446
        %v448 = vrcp.pop %v445
        %v449 = vmul.f32 1.0, %v448
        %v450 = vmul.f32 %v447, %v424
        %v451 = vmul.f32 %v449, %v425
        %v452 = vtanh.pop %v408
        %v453 = vtanh.pop %v410
        %v454 = vmul.f32 %v435, %v452
        %v455 = vmul.f32 %v437, %v453
        %v456 = vadd.f32 %v450, %v454
        %v457 = vadd.f32 %v451, %v455
        %v458 = vxor.u32 %v420, 2147483648
        %v459 = vxor.u32 %v422, 2147483648
        %v460 = vmul.f32 %v458, 1.442695
        %v461 = vpow.pop %v460
        %v462 = vmul.f32 %v459, 1.442695
        %v463 = vpow.pop %v462
        %v464 = vadd.f32 %v461, 1.0
        %v465 = vadd.f32 %v463, 1.0
        %v466 = vrcp.pop %v464
        %v467 = vmul.f32 1.0, %v466
        %v468 = vrcp.pop %v465
        %v469 = vmul.f32 1.0, %v468
        %v470 = vtanh.pop %v456
        %v471 = vtanh.pop %v457
        %v472 = vmul.f32 %v467, %v470
        %v473 = vmul.f32 %v469, %v471
        %474 = vst [vmem:[%s278] sm:$0xff] %v456
        %475 = vst [vmem:[%s278 + $0x8] sm:$0xff] %v457
        %476 = vst [vmem:[%s271] sm:$0xff] %v472
        %477 = vst [vmem:[%s271 + $0x8] sm:$0xff] %v473
        %s478 = sand.u32 %s109, 1
        %s479 = scalar_lea.sflag [#allocation4], %s478
        %s480 = sand.u32 %s109, 1
        %s481 = smul.addr %s480, 16
        %s482 = scalar_lea.vmem [#allocation8], %s481
        %s483 = sand.u32 %s135, 1
        %s484 = scalar_lea.sflag [#allocation10], %s483
        %s485 = sand.u32 %s135, 1
        %s486 = smul.addr %s485, 16
        %s487 = scalar_lea.vmem [#allocation9], %s486
        // Predicated region
        $region45: #{tpu_custom_call.1} parent=31 // pred_check
          %p488 = pneg %p119
        $region46: #{tpu_custom_call.1} parent=31 // pred_check_branch
          %490 = sbr.rel (%p488) target = $region48
        $region47: #{tpu_custom_call.1} parent=31 // pred_region
          %s491 = smul.u32 2, %s28
          %s493 = ssub.s32 256, 256
          %494 = vsyncadd %s479, %s493
          %s495 = smul.addr %s491, 128
          %s496 = scalar_lea.hbm %s3, %s495
          %s498 = sshll.u32 %s482, 4
          %s499 = int_to_ptr.vmem [resolvable:$true] %s498
          %501 = dma.vmem_to_hbm [thread:$0]  %s499, 256, %s496, %s479
        $region48: #{tpu_custom_call.1} parent=31 // pred_fallthru
          _
        // Predicated region
        $region49: #{tpu_custom_call.1} parent=31 // pred_check
          %p502 = pneg %p145
        $region50: #{tpu_custom_call.1} parent=31 // pred_check_branch
          %504 = sbr.rel (%p502) target = $region52
        $region51: #{tpu_custom_call.1} parent=31 // pred_region
          %s505 = smul.u32 2, %s28
          %s507 = ssub.s32 256, 256
          %508 = vsyncadd %s484, %s507
          %s509 = smul.addr %s505, 128
          %s510 = scalar_lea.hbm %s4, %s509
          %s512 = sshll.u32 %s487, 4
          %s513 = int_to_ptr.vmem [resolvable:$true] %s512
          %515 = dma.vmem_to_hbm [thread:$0]  %s513, 256, %s510, %s484
        $region52: #{tpu_custom_call.1} parent=31 // pred_fallthru
          _
      $region32: #{tpu_custom_call.1} parent=5 // pred_fallthru
        _
      %p516 = scmp.le.s32.totalorder 2, %s23
      // Predicated region
      $region53: #{tpu_custom_call.1} parent=5 // pred_check
        %p517 = pneg %p516
      $region54: #{tpu_custom_call.1} parent=5 // pred_check_branch
        %519 = sbr.rel (%p517) target = $region56
      $region55: #{tpu_custom_call.1} parent=5 // pred_region
        %s520 = ssub.s32 %s23, 2
        // Predicated region
        $region57: #{tpu_custom_call.1} parent=55 // pred_check
          %p521 = pneg %p125
        $region58: #{tpu_custom_call.1} parent=55 // pred_check_branch
          %523 = sbr.rel (%p521) target = $region60
        $region59: #{tpu_custom_call.1} parent=55 // pred_region
          %s524 = sand.u32 %s110, 1
          %s525 = scalar_lea.sflag [#allocation4], %s524
          %s526 = sand.u32 %s110, 1
          %s527 = smul.addr %s526, 16
          %s528 = scalar_lea.vmem [#allocation8], %s527
          %529 = dma.done %s525, 256
        $region60: #{tpu_custom_call.1} parent=55 // pred_fallthru
          _
        // Predicated region
        $region61: #{tpu_custom_call.1} parent=55 // pred_check
          %p530 = pneg %p151
        $region62: #{tpu_custom_call.1} parent=55 // pred_check_branch
          %532 = sbr.rel (%p530) target = $region64
        $region63: #{tpu_custom_call.1} parent=55 // pred_region
          %s533 = sand.u32 %s136, 1
          %s534 = scalar_lea.sflag [#allocation10], %s533
          %s535 = sand.u32 %s136, 1
          %s536 = smul.addr %s535, 16
          %s537 = scalar_lea.vmem [#allocation9], %s536
          %538 = dma.done %s534, 256
        $region64: #{tpu_custom_call.1} parent=55 // pred_fallthru
          _
      $region56: #{tpu_custom_call.1} parent=5 // pred_fallthru
        _
    $region6: #{tpu_custom_call.1} parent=1 // loop_footer
      %s27 = sadd.s32 1, %s23
    $region7: #{tpu_custom_call.1} parent=1 // loop_footer_branch
      %22 = sbr.rel target = $region3
    $region8: #{tpu_custom_call.1} parent=1 // loop_exit
      _
    %539 = vsyncpa [#allocation3], 1
    %s540 = scalar_lea.sflag [#allocation3], 1
    %541 = vsyncpa %s540, 1
    %542 = vsyncpa [#allocation6], 1
    %s543 = scalar_lea.sflag [#allocation6], 1
    %544 = vsyncpa %s543, 1
    %545 = vsyncpa [#allocation4], 1
    %s546 = scalar_lea.sflag [#allocation4], 1
    %547 = vsyncpa %s546, 1
    %548 = vsyncpa [#allocation10], 1
    %s549 = scalar_lea.sflag [#allocation10], 1
    %550 = vsyncpa %s549, 1

</llo_original>
